<compile_context>
chip_gen: v7x
topology: tpu7x:2x2x1
jax: 0.10.0
libtpu: 0.0.40
codegen_flags: <defaults>
</compile_context>

<pallas_src>
import functools

import jax
import jax.numpy as jnp
from jax.experimental import pallas as pl
from jax.experimental.pallas import tpu as pltpu

LANE = 128


def value_net_kernel(xt_ref, w1_ref, b1_ref, w2_ref, b2_ref, o_ref):
    # xt_ref: (S, TB) bf16   -- batch tile on lanes (pipelined per grid step)
    # w1_ref: (H, S)  bf16   -- resident across grid steps
    # b1_ref: (H, 1)  f32    -- resident
    # w2_ref: (H, 1)  f32    -- resident
    # b2_ref: (1, 1)  f32 in SMEM (scalar)
    # o_ref : (1, TB) f32    -- lane-dense value row
    # fc1 on the MXU with f32 accumulation.
    h = jnp.dot(w1_ref[...], xt_ref[...],
                preferred_element_type=jnp.float32)          # (H, TB)
    # Bias + ReLU in f32 on the VPU (b1 broadcast over lanes).
    h = jnp.maximum(h + b1_ref[...], 0.0)
    # fc2 as VPU multiply + sublane (XLU) reduction instead of an N=1 MXU matmul.
    v = jnp.sum(h * w2_ref[...], axis=0, keepdims=True)      # (1, TB)
    o_ref[...] = (v + b2_ref[0, 0]).astype(o_ref.dtype)


@functools.partial(jax.jit, static_argnames=("block_b",))
def value_net_forward(x, w1, b1, w2, b2, *, block_b=512):
    """ValueNet forward: relu(x @ w1.T + b1) @ w2 + b2.

    x: (B, S) f32; w1: (H, S); b1: (H,); w2: (H,); b2: () -- PyTorch layouts.
    block_b: batch-tile (lane) width, multiple of 128. ~512 is a good default for
    v5e/v6e (128 MiB VMEM); use ~256 on v7x (64 MiB VMEM, 2 TensorCores).
    Returns (B, 1).
    """
    B, S = x.shape
    H = w1.shape[0]
    assert block_b % LANE == 0

    # Pad the batch to a multiple of the lane tile and put it on the grid.
    tb = min(block_b, pl.cdiv(B, LANE) * LANE)
    b_pad = pl.cdiv(B, tb) * tb
    grid_n = b_pad // tb

    # Pad + transpose + bf16 cast fuse into a single XLA copy under jit.
    xt = jnp.pad(x, ((0, b_pad - B), (0, 0))).T.astype(jnp.bfloat16)  # (S, b_pad)
    w1_bf = w1.astype(jnp.bfloat16)                                    # (H, S)
    b1_col = b1.reshape(H, 1).astype(jnp.float32)
    w2_col = w2.reshape(H, 1).astype(jnp.float32)
    b2_sc = jnp.asarray(b2, jnp.float32).reshape(1, 1)

    cost = pl.CostEstimate(
        flops=2 * b_pad * S * H + 4 * b_pad * H,
        transcendentals=0,
        bytes_accessed=(xt.size * 2 + w1_bf.size * 2
                        + (b1_col.size + w2_col.size + 1 + b_pad) * 4),
    )

    out = pl.pallas_call(
        value_net_kernel,
        out_shape=jax.ShapeDtypeStruct((1, b_pad), jnp.float32),
        grid_spec=pl.GridSpec(
            grid=(grid_n,),
            in_specs=[
                pl.BlockSpec((S, tb), lambda i: (0, i)),            # x^T tile
                pl.BlockSpec((H, S), lambda i: (0, 0)),             # w1 resident
                pl.BlockSpec((H, 1), lambda i: (0, 0)),             # b1 resident
                pl.BlockSpec((H, 1), lambda i: (0, 0)),             # w2 resident
                pl.BlockSpec(memory_space=pltpu.MemorySpace.SMEM),  # b2 scalar
            ],
            out_specs=pl.BlockSpec((1, tb), lambda i: (0, i)),
        ),
        compiler_params=pltpu.CompilerParams(
            dimension_semantics=("parallel",),
        ),
        cost_estimate=cost,
    )(xt, w1_bf, b1_col, w2_col, b2_sc)

    return out[0, :B].reshape(B, 1).astype(x.dtype)


def init_params(key, state_dim, hidden_dim):
    """Deterministic init mimicking torch.nn.Linear defaults (PyTorch layouts)."""
    k1, k2, k3, k4 = jax.random.split(key, 4)
    bound1 = 1.0 / (state_dim ** 0.5)
    bound2 = 1.0 / (hidden_dim ** 0.5)
    w1 = jax.random.uniform(k1, (hidden_dim, state_dim), jnp.float32, -bound1, bound1)
    b1 = jax.random.uniform(k2, (hidden_dim,), jnp.float32, -bound1, bound1)
    w2 = jax.random.uniform(k3, (hidden_dim,), jnp.float32, -bound2, bound2)
    b2 = jax.random.uniform(k4, (), jnp.float32, -bound2, bound2)
    return w1, b1, w2, b2


if __name__ == "__main__":
    state_dim = 16
    hidden_dim = 32
    batch = 8

    key = jax.random.PRNGKey(0)
    kp, kx = jax.random.split(key)
    w1, b1, w2, b2 = init_params(kp, state_dim, hidden_dim)
    x = jax.random.normal(kx, (batch, state_dim), jnp.float32)

    out = value_net_forward(x, w1, b1, w2, b2)
    out = jax.block_until_ready(out)
    assert out.shape == (batch, 1)

    # bf16-faithful reference (kernel uses bf16 MXU operands, f32 accumulate).
    xb = x.astype(jnp.bfloat16).astype(jnp.float32)
    w1b = w1.astype(jnp.bfloat16).astype(jnp.float32)
    ref_bf = jnp.maximum(xb @ w1b.T + b1, 0.0) @ w2.reshape(-1, 1) + b2
    assert jnp.allclose(out, ref_bf, atol=1e-4, rtol=1e-4)

    # Full-precision sanity check (loose tolerance due to bf16 operands).
    ref = jnp.maximum(x @ w1.T + b1, 0.0) @ w2.reshape(-1, 1) + b2
    assert jnp.allclose(out, ref, atol=3e-2, rtol=3e-2)

    print("KERNEL_OK")
</pallas_src>

<mosaic_0001>
module attributes {stable_mosaic.version = 11 : i64} {
  func.func @value_net_kernel(%arg0: i32, %arg1: memref<16x128xbf16, #tpu.memory_space<vmem>>, %arg2: memref<32x16xbf16, #tpu.memory_space<vmem>>, %arg3: memref<32x1xf32, #tpu.memory_space<vmem>>, %arg4: memref<32x1xf32, #tpu.memory_space<vmem>>, %arg5: memref<1x1xf32, #tpu.memory_space<smem>>, %arg6: memref<1x128xf32, #tpu.memory_space<vmem>>) attributes {dimension_semantics = [#tpu.dimension_semantics<parallel>], iteration_bounds = array<i64: 1>, scalar_prefetch = 0 : i64, scratch_operands = 0 : i64, tpu.core_type = #tpu.core_type<tc>, window_params = [{transform_indices = @transform_0, window_bounds = array<i64: 16, 128>}, {pipeline_mode = #tpu.pipeline_mode<synchronous>, transform_indices = @transform_1, window_bounds = array<i64: 32, 16>}, {pipeline_mode = #tpu.pipeline_mode<synchronous>, transform_indices = @transform_2, window_bounds = array<i64: 32, 1>}, {pipeline_mode = #tpu.pipeline_mode<synchronous>, transform_indices = @transform_3, window_bounds = array<i64: 32, 1>}, {transform_indices = @transform_4, window_bounds = array<i64: 1, 1>}, {transform_indices = @transform_5, window_bounds = array<i64: 1, 128>}]} {
    %c0 = arith.constant 0 : index
    %c0_0 = arith.constant 0 : index
    %0 = vector.load %arg2[%c0, %c0_0] : memref<32x16xbf16, #tpu.memory_space<vmem>>, vector<32x16xbf16>
    %c0_1 = arith.constant 0 : index
    %c0_2 = arith.constant 0 : index
    %1 = vector.load %arg1[%c0_1, %c0_2] : memref<16x128xbf16, #tpu.memory_space<vmem>>, vector<16x128xbf16>
    %cst = arith.constant dense<0.000000e+00> : vector<32x128xf32>
    %2 = tpu.matmul %0, %1, %cst {dimension_numbers = #tpu.dot_dimension_numbers<[1], [0], [0], [1], [0, 0, 1, 1], [], []>} : vector<32x16xbf16>, vector<16x128xbf16>, vector<32x128xf32> -> vector<32x128xf32>
    %c0_3 = arith.constant 0 : index
    %c0_4 = arith.constant 0 : index
    %3 = vector.load %arg3[%c0_3, %c0_4] : memref<32x1xf32, #tpu.memory_space<vmem>>, vector<32x1xf32>
    %4 = vector.broadcast %3 : vector<32x1xf32> to vector<32x128xf32>
    %5 = arith.addf %2, %4 : vector<32x128xf32>
    %cst_5 = arith.constant 0.000000e+00 : f32
    %6 = vector.broadcast %cst_5 : f32 to vector<32x128xf32>
    %7 = arith.maximumf %5, %6 : vector<32x128xf32>
    %c0_6 = arith.constant 0 : index
    %c0_7 = arith.constant 0 : index
    %8 = vector.load %arg4[%c0_6, %c0_7] : memref<32x1xf32, #tpu.memory_space<vmem>>, vector<32x1xf32>
    %9 = vector.broadcast %8 : vector<32x1xf32> to vector<32x128xf32>
    %10 = arith.mulf %7, %9 : vector<32x128xf32>
    %cst_8 = arith.constant dense<0.000000e+00> : vector<128xf32>
    %11 = vector.multi_reduction <add>, %10, %cst_8 [0] : vector<32x128xf32> to vector<128xf32>
    %12 = vector.shape_cast %11 : vector<128xf32> to vector<1x128xf32>
    %c0_9 = arith.constant 0 : index
    %c0_10 = arith.constant 0 : index
    %13 = memref.load %arg5[%c0_9, %c0_10] : memref<1x1xf32, #tpu.memory_space<smem>>
    %14 = vector.broadcast %13 : f32 to vector<1x128xf32>
    %15 = arith.addf %12, %14 : vector<1x128xf32>
    %c0_11 = arith.constant 0 : index
    %c0_12 = arith.constant 0 : index
    %16 = vector.load %arg6[%c0_11, %c0_12] : memref<1x128xf32, #tpu.memory_space<vmem>>, vector<1x128xf32>
    tpu.vector_store %arg6[%c0_11, %c0_12], %15 {strides = array<i32>} : memref<1x128xf32, #tpu.memory_space<vmem>>, vector<1x128xf32>,
    return
  }
  func.func @transform_0(%arg0: i32) -> (i32, i32) {
    %c0_i32 = arith.constant 0 : i32
    %c0_i32_0 = arith.constant 0 : i32
    return %c0_i32, %arg0 : i32, i32
  }
  func.func @transform_1(%arg0: i32) -> (i32, i32) {
    %c0_i32 = arith.constant 0 : i32
    %c0_i32_0 = arith.constant 0 : i32
    %c0_i32_1 = arith.constant 0 : i32
    return %c0_i32, %c0_i32_0 : i32, i32
  }
  func.func @transform_2(%arg0: i32) -> (i32, i32) {
    %c0_i32 = arith.constant 0 : i32
    %c0_i32_0 = arith.constant 0 : i32
    %c0_i32_1 = arith.constant 0 : i32
    return %c0_i32, %c0_i32_0 : i32, i32
  }
  func.func @transform_3(%arg0: i32) -> (i32, i32) {
    %c0_i32 = arith.constant 0 : i32
    %c0_i32_0 = arith.constant 0 : i32
    %c0_i32_1 = arith.constant 0 : i32
    return %c0_i32, %c0_i32_0 : i32, i32
  }
  func.func @transform_4(%arg0: i32) -> (i32, i32) {
    %c0_i32 = arith.constant 0 : i32
    %c0_i32_0 = arith.constant 0 : i32
    %c0_i32_1 = arith.constant 0 : i32
    return %c0_i32, %c0_i32_0 : i32, i32
  }
  func.func @transform_5(%arg0: i32) -> (i32, i32) {
    %c0_i32 = arith.constant 0 : i32
    %c0_i32_0 = arith.constant 0 : i32
    return %c0_i32, %arg0 : i32, i32
  }
}

</mosaic_0001>

<llo_original>
// kernel: value_net_forward.1
$region0: #{value_net_forward.1}
  #allocation0 [shape = 'u32[]', space=smem, size = 0x4, offset = 0x4, fixed_abs, tag = 'smem constant byte address 0x4 - core index']
  #allocation1 [shape = 'u32[144,128]{1,0:T(1,128)}', space=vmem, size = 0x12000, scoped, tag = 'internal scratch']
  #allocation2 [shape = 'f32[1,1]{1,0:T(1,128)S(6)}', space=smem, size = 0x200, scoped, tag = 'scoped memory for value_net_forward.1']
  %s0 = inlined_call_operand.vmem [shape: bf16[16,128], index: 0, kind: input, shape index: {}]
  %s1 = inlined_call_operand.vmem [shape: bf16[32,16], index: 1, kind: input, shape index: {}]
  %s2 = inlined_call_operand.vmem [shape: f32[32,1], index: 2, kind: input, shape index: {}]
  %s3 = inlined_call_operand.vmem [shape: f32[32,1], index: 3, kind: input, shape index: {}]
  %s4 = inlined_call_operand.<no memory space> [shape: f32[1,1], index: 4, kind: input, shape index: {}]
  %s5 = inlined_call_operand.vmem [shape: f32[1,128], index: 5, kind: output, shape index: {}]
  %s6 = sld [smem:[#allocation0]]
  $region30: #{value_net_forward.1} parent=0
    _
  %s8 = ssub.s32 1, %s6
  %s9 = scalar_select 0, %s8, %s6
  %10 = sst [smem:[#allocation2]] %s4
  // Predicated region
  $region2: #{value_net_forward.1} parent=0 // pred_check
    _
  $region3: #{value_net_forward.1} parent=0 // pred_check_branch
    %12 = sbr.rel (0) target = $region5
  $region4: #{value_net_forward.1} parent=0 // pred_region
    _
  $region5: #{value_net_forward.1} parent=0 // pred_fallthru
    _
  // Predicated region
  $region6: #{value_net_forward.1} parent=0 // pred_check
    _
  $region7: #{value_net_forward.1} parent=0 // pred_check_branch
    %14 = sbr.rel (0) target = $region9
  $region8: #{value_net_forward.1} parent=0 // pred_region
    _
  $region9: #{value_net_forward.1} parent=0 // pred_fallthru
    _
  // Predicated region
  $region10: #{value_net_forward.1} parent=0 // pred_check
    _
  $region11: #{value_net_forward.1} parent=0 // pred_check_branch
    %16 = sbr.rel (0) target = $region13
  $region12: #{value_net_forward.1} parent=0 // pred_region
    _
  $region13: #{value_net_forward.1} parent=0 // pred_fallthru
    _
  // Predicated region
  $region14: #{value_net_forward.1} parent=0 // pred_check
    _
  $region15: #{value_net_forward.1} parent=0 // pred_check_branch
    %18 = sbr.rel (0) target = $region17
  $region16: #{value_net_forward.1} parent=0 // pred_region
    _
  $region17: #{value_net_forward.1} parent=0 // pred_fallthru
    _
  // Predicated region
  $region18: #{value_net_forward.1} parent=0 // pred_check
    _
  $region19: #{value_net_forward.1} parent=0 // pred_check_branch
    %20 = sbr.rel (0) target = $region21
  $region20: #{value_net_forward.1} parent=0 // pred_region
    _
  $region21: #{value_net_forward.1} parent=0 // pred_fallthru
    _
  %v22 = vld [vmem:[%s1] sm:$0xf]
  %v23 = vld [vmem:[%s1 + $0x4] sm:$0xf]
  %v24 = vld [vmem:[%s1 + $0x8] sm:$0xf]
  %v25 = vld [vmem:[%s1 + $0xc] sm:$0xf]
  %v26 = vld [vmem:[%s0] sm:$0xf]
  %v27 = vld [vmem:[%s0 + $0x4] sm:$0xf]
  %v28 = vld [vmem:[%s2] sm:$0xff]
  %v29 = vld [vmem:[%s2 + $0x8] sm:$0xff]
  %v30 = vld [vmem:[%s2 + $0x10] sm:$0xff]
  %v31 = vld [vmem:[%s2 + $0x18] sm:$0xff]
  %33 = vset.pattern.permute.xlu0 0
  %34 = vperm.xlu0 %33, %v28
  %v35 = vpop.permute.xlu0 %34
  %38 = vset.pattern.permute.xlu0 0
  %39 = vperm.xlu0 %38, %v29
  %v40 = vpop.permute.xlu0 %39
  %43 = vset.pattern.permute.xlu0 0
  %44 = vperm.xlu0 %43, %v30
  %v45 = vpop.permute.xlu0 %44
  %48 = vset.pattern.permute.xlu0 0
  %49 = vperm.xlu0 %48, %v31
  %v50 = vpop.permute.xlu0 %49
  %v56 = vunpack.c.l.b16 %v22
  %v57 = vunpack.c.l.b16 %v23
  %v58 = vunpack.c.l.b16 %v24
  %v59 = vunpack.c.l.b16 %v25
  %v60 = vpack.c.b16 %v57, %v56
  %v61 = vpack.c.b16 %v59, %v58
  %v64 = vunpack.c.l.b16 %v26
  %v65 = vunpack.c.l.b16 %v27
  %v66 = vpack.c.b16 %v65, %v64
  %vm68 = vcmask 130048
  %v70 = vsel %vm68, %v60, 0
  %v73 = vsel %vm68, %v61, 0
  %75 = vmatprep.subr.bf16.mxu0 0
  %76 = vmatpush1.bf16.msra.mxu0 %v66
  %77 = vmatprep.subr.bf16.mxu0 0
  %78 = vmatpush1.bf16.msra.mxu0 0
  %79 = vmatprep.subr.bf16.mxu0 0
  %80 = vmatpush1.bf16.msra.mxu0 0
  %81 = vmatprep.subr.bf16.mxu0 0
  %82 = vmatpush1.bf16.msra.mxu0 0
  %83 = vmatprep.subr.bf16.mxu0 0
  %84 = vmatpush1.bf16.msra.mxu0 0
  %85 = vmatprep.subr.bf16.mxu0 0
  %86 = vmatpush1.bf16.msra.mxu0 0
  %87 = vmatprep.subr.bf16.mxu0 0
  %88 = vmatpush1.bf16.msra.mxu0 0
  %89 = vmatprep.subr.bf16.mxu0 0
  %90 = vmatpush1.bf16.msra.mxu0 0
  %91 = vmatprep.subr.bf16.mxu0 0
  %92 = vmatpush1.bf16.msra.mxu0 0
  %93 = vmatprep.subr.bf16.mxu0 0
  %94 = vmatpush1.bf16.msra.mxu0 0
  %95 = vmatprep.subr.bf16.mxu0 0
  %96 = vmatpush1.bf16.msra.mxu0 0
  %97 = vmatprep.subr.bf16.mxu0 0
  %98 = vmatpush1.bf16.msra.mxu0 0
  %99 = vmatprep.subr.bf16.mxu0 0
  %100 = vmatpush1.bf16.msra.mxu0 0
  %101 = vmatprep.subr.bf16.mxu0 0
  %102 = vmatpush1.bf16.msra.mxu0 0
  %103 = vmatprep.subr.bf16.mxu0 0
  %104 = vmatpush1.bf16.msra.mxu0 0
  %105 = vmatprep.subr.bf16.mxu0 0
  %106 = vmatpush1.bf16.msra.mxu0 0
  %107 = vmatprep.mubr.bf16.mxu0 0
  %108 = vmatmul.mubr.bf16.gmra.mrb[0].mxu0 %v70
  %v109 = vpop.f32.mrb[0].mxu0
  %v110 = vadd.f32 %v35, %v109
  %v111 = vpop.f32.mrb[0].mxu0
  %v112 = vpop.f32.mrb[0].mxu0
  %v113 = vadd.f32 %v40, %v112
  %v114 = vpop.f32.mrb[0].mxu0
  %115 = vmatprep.mubr.bf16.mxu0 0
  %116 = vmatmul.mubr.bf16.gmra.mrb[0].mxu0 %v73
  %v117 = vpop.f32.mrb[0].mxu0
  %v118 = vadd.f32 %v45, %v117
  %v119 = vpop.f32.mrb[0].mxu0
  %v120 = vpop.f32.mrb[0].mxu0
  %v121 = vadd.f32 %v50, %v120
  %v122 = vpop.f32.mrb[0].mxu0
  %123 = vdwg.mxu0
  %v124 = vmax.f32 %v110, 0.0
  %v125 = vmax.f32 %v113, 0.0
  %v126 = vmax.f32 %v118, 0.0
  %v127 = vmax.f32 %v121, 0.0
  %v128 = vld [vmem:[%s3] sm:$0xff]
  %v129 = vld [vmem:[%s3 + $0x8] sm:$0xff]
  %v130 = vld [vmem:[%s3 + $0x10] sm:$0xff]
  %v131 = vld [vmem:[%s3 + $0x18] sm:$0xff]
  %133 = vset.pattern.permute.xlu0 0
  %134 = vperm.xlu0 %133, %v128
  %v135 = vpop.permute.xlu0 %134
  %138 = vset.pattern.permute.xlu0 0
  %139 = vperm.xlu0 %138, %v129
  %v140 = vpop.permute.xlu0 %139
  %143 = vset.pattern.permute.xlu0 0
  %144 = vperm.xlu0 %143, %v130
  %v145 = vpop.permute.xlu0 %144
  %148 = vset.pattern.permute.xlu0 0
  %149 = vperm.xlu0 %148, %v131
  %v150 = vpop.permute.xlu0 %149
  %v152 = vmul.f32 %v124, %v135
  %v153 = vmul.f32 %v125, %v140
  %v154 = vmul.f32 %v126, %v145
  %v155 = vmul.f32 %v127, %v150
  %v156 = vadd.f32 %v152, %v153
  %v157 = vadd.f32 %v156, %v154
  %v158 = vadd.f32 %v157, %v155
  %v159 = vrot.slane %v158, 4
  %v160 = vadd.f32 %v158, %v159
  %v161 = vrot.slane %v160, 2
  %v162 = vadd.f32 %v160, %v161
  %v163 = vrot.slane %v162, 1
  %v164 = vadd.f32 %v162, %v163
  %s165 = sld [smem:[#allocation2]]
  %v166 = vstv %s165
  %v167 = vadd.f32 %v164, %v166
  %168 = vst [vmem:[%s5] sm:$0x1] %v167
  // Predicated region
  $region22: #{value_net_forward.1} parent=0 // pred_check
    _
  $region23: #{value_net_forward.1} parent=0 // pred_check_branch
    %170 = sbr.rel (0) target = $region25
  $region24: #{value_net_forward.1} parent=0 // pred_region
    _
  $region25: #{value_net_forward.1} parent=0 // pred_fallthru
    _
  // Predicated region
  $region26: #{value_net_forward.1} parent=0 // pred_check
    _
  $region27: #{value_net_forward.1} parent=0 // pred_check_branch
    %172 = sbr.rel (0) target = $region29
  $region28: #{value_net_forward.1} parent=0 // pred_region
    _
  $region29: #{value_net_forward.1} parent=0 // pred_fallthru
    _

</llo_original>
